<compile_context>
chip_gen: v6e
topology: v6e:2x2x1
jax: 0.10.0
libtpu: 0.0.40
codegen_flags: <defaults>
</compile_context>

<pallas_src>
import math
from functools import partial

import jax
import jax.numpy as jnp
from jax.experimental import pallas as pl
from jax.experimental.pallas import tpu as pltpu

LANE = 128  # TPU lane width


# ----------------------------------------------------------------------------
# Parameter initialization (deterministic, PyTorch-like uniform fan-in init)
# ----------------------------------------------------------------------------
def init_linear(key, din, dout):
    k1, k2 = jax.random.split(key)
    bound = 1.0 / math.sqrt(din)
    w = jax.random.uniform(k1, (din, dout), jnp.float32, -bound, bound)
    b = jax.random.uniform(k2, (dout,), jnp.float32, -bound, bound)
    return {"w": w, "b": b}


def init_mlp(key, num_layers, input_dim, hidden_dim, output_dim,
             use_batch_norm=True):
    """Mirror MLP.__init__ (num_layers >= 1)."""
    # TODO(synk): num_layers < 1 (nn.Identity encoder) is not supported here.
    assert num_layers >= 1
    if num_layers == 1:
        return {"is_linear": True,
                "layers": [init_linear(key, input_dim, output_dim)]}
    layers = []
    last = input_dim
    keys = jax.random.split(key, num_layers)
    hiddens = [hidden_dim] * (num_layers - 1)
    for i, h in enumerate(hiddens):
        lin = init_linear(keys[i], last, h)
        lin["use_bn"] = use_batch_norm
        lin["gamma"] = jnp.ones((h,), jnp.float32)
        lin["beta"] = jnp.zeros((h,), jnp.float32)
        layers.append(lin)
        last = h
    layers.append(init_linear(keys[-1], last, output_dim))
    return {"is_linear": False, "layers": layers}


def init_mlp_wrapper(key, out_dim, num_layers, input_dim, hidden_dim,
                     mlp_output_dim, use_batch_norm=True):
    k1, k2 = jax.random.split(key)
    return {"mlp": init_mlp(k1, num_layers, input_dim, hidden_dim,
                            mlp_output_dim, use_batch_norm),
            "out_layer": init_linear(k2, mlp_output_dim, out_dim)}


# ----------------------------------------------------------------------------
# Pack-time helpers
# ----------------------------------------------------------------------------
def _rup(n, m):
    return ((n + m - 1) // m) * m


def _pad2(a, rows, cols):
    return jnp.pad(a, ((0, rows - a.shape[0]), (0, cols - a.shape[1])))


def _pad1(v, width):
    return jnp.pad(v, (0, width - v.shape[0]))


def _block_diag(blocks):
    if len(blocks) == 1:
        return blocks[0]
    rows = sum(b.shape[0] for b in blocks)
    cols = sum(b.shape[1] for b in blocks)
    out = jnp.zeros((rows, cols), jnp.float32)
    r = c = 0
    for b in blocks:
        out = out.at[r:r + b.shape[0], c:c + b.shape[1]].set(b)
        r += b.shape[0]
        c += b.shape[1]
    return out


# ----------------------------------------------------------------------------
# Pack-time horizontal fusion of the parallel encoders into two VMEM slabs
# ----------------------------------------------------------------------------
def pack_encoder_network(params, eps=1e-5):
    """Build the static fusion plan + two lane-dense parameter slabs.

    Weight slab:  each fused weight zero-padded to (rows_used, k*128) lanes,
                  rows padded to a multiple of 8, stacked along sublanes.
    Vector slab:  one 8-row block per fused layer:
                  row0 = bias, row1 = gamma, row2 = beta, row3 = bn-mask.
    """
    encoders = list(params["pretrained_encoders"]) + list(params["base_encoders"])
    cores, wraps = [], []
    for enc in encoders:
        if "out_layer" in enc:                       # MLPWrapper
            cores.append(enc["mlp"])
            wraps.append(enc["out_layer"])
        else:                                        # plain MLP
            cores.append(enc)
            wraps.append(None)

    core_out_dims, emb_dims = [], []
    for core, wrap in zip(cores, wraps):
        cd = core["layers"][-1]["w"].shape[1]
        core_out_dims.append(cd)
        emb_dims.append(wrap["w"].shape[1] if wrap is not None else cd)
    emb_offsets = [0]
    for d in emb_dims[:-1]:
        emb_offsets.append(emb_offsets[-1] + d)
    emb_total = sum(emb_dims)
    emb_pad = _rup(emb_total, LANE)
    din = cores[0]["layers"][0]["w"].shape[0]

    w_list = []   # (rows_used, cols_padded_to_128) arrays
    v_list = []   # (k<=4, cols_padded_to_128) arrays

    def add_w(a, rows=None):
        a = jnp.asarray(a, jnp.float32)
        r = a.shape[0] if rows is None else rows
        c = _rup(a.shape[1], LANE)
        w_list.append(_pad2(a, r, c))
        return len(w_list) - 1

    def add_v(row_vecs, width_pad):
        mat = jnp.stack([_pad1(jnp.asarray(v, jnp.float32), width_pad)
                         for v in row_vecs], axis=0)
        v_list.append(mat)
        return len(v_list) - 1

    # group multi-layer encoders by depth; single-layer ones go to the
    # "direct" x @ W_direct path.
    depth_to_members, singles = {}, []
    for idx, core in enumerate(cores):
        if core["is_linear"]:
            singles.append(idx)
        else:
            depth_to_members.setdefault(len(core["layers"]), []).append(idx)

    b_emb = jnp.zeros((emb_total,), jnp.float32)
    groups_plan = []

    for depth in sorted(depth_to_members):
        members = depth_to_members[depth]
        layers_plan = []
        prev_pad = din
        # hidden layers (Linear + [BN] + ReLU), fused lane-wide
        for li in range(depth - 1):
            w_blocks, bs, gs, bes, ms, bns = [], [], [], [], [], []
            for mi in members:
                lay = cores[mi]["layers"][li]
                width = lay["w"].shape[1]
                use_bn = lay.get("use_bn", False)
                w_blocks.append(lay["w"])
                bs.append(lay["b"])
                gs.append(lay["gamma"] if use_bn
                          else jnp.ones((width,), jnp.float32))
                bes.append(lay["beta"] if use_bn
                           else jnp.zeros((width,), jnp.float32))
                ms.append(jnp.full((width,), 1.0 if use_bn else 0.0,
                                   jnp.float32))
                bns.append(use_bn)
            if li == 0:
                w_fused = jnp.concatenate(w_blocks, axis=1)   # (din, sum_w)
                rows = din
            else:
                w_fused = _block_diag(w_blocks)                # (prev, sum_w)
                rows = prev_pad
            out_pad = _rup(w_fused.shape[1], LANE)
            widx = add_w(w_fused, rows=rows)
            vidx = add_v([jnp.concatenate(bs), jnp.concatenate(gs),
                          jnp.concatenate(bes), jnp.concatenate(ms)], out_pad)
            bn_mode = ("all" if all(bns)
                       else ("none" if not any(bns) else "mixed"))
            layers_plan.append({"w": widx, "v": vidx, "kind": "hidden",
                                "bn": bn_mode})
            prev_pad = out_pad

        # final Linear of each member, block-diagonal
        w_fused = _block_diag([cores[mi]["layers"][-1]["w"] for mi in members])
        b_fused = jnp.concatenate(
            [cores[mi]["layers"][-1]["b"] for mi in members])
        final_real = w_fused.shape[1]
        final_pad = _rup(final_real, LANE)
        widx = add_w(w_fused, rows=prev_pad)
        vidx = add_v([b_fused], final_pad)
        layers_plan.append({"w": widx, "v": vidx, "kind": "final"})

        # embedding-assembly matrix: identity blocks for plain MLPs,
        # wrapper out_layer weights for MLPWrappers (bias -> b_emb).
        A = jnp.zeros((final_real, emb_total), jnp.float32)
        r = 0
        for mi in members:
            cd, ed, eo = core_out_dims[mi], emb_dims[mi], emb_offsets[mi]
            if wraps[mi] is None:
                A = A.at[r:r + cd, eo:eo + ed].set(
                    jnp.eye(cd, dtype=jnp.float32))
            else:
                A = A.at[r:r + cd, eo:eo + ed].set(wraps[mi]["w"])
                b_emb = b_emb.at[eo:eo + ed].add(wraps[mi]["b"])
            r += cd
        groups_plan.append({"layers": layers_plan,
                            "assemble": add_w(A, rows=final_pad)})

    # single-layer encoders: fold (and any wrapper) into one direct matmul
    direct_idx = None
    if singles:
        W_direct = jnp.zeros((din, emb_total), jnp.float32)
        for mi in singles:
            lay = cores[mi]["layers"][0]
            w_eff, b_eff = lay["w"], lay["b"]
            if wraps[mi] is not None:
                w_eff = w_eff @ wraps[mi]["w"]
                b_eff = b_eff @ wraps[mi]["w"] + wraps[mi]["b"]
            eo, ed = emb_offsets[mi], emb_dims[mi]
            W_direct = W_direct.at[:, eo:eo + ed].set(w_eff)
            b_emb = b_emb.at[eo:eo + ed].add(b_eff)
        direct_idx = add_w(W_direct, rows=din)

    b_emb_idx = add_v([b_emb], emb_pad)

    # finetuner MLP chain (input width = emb_pad inside the kernel)
    ft = params["finetuner_module"]
    ft_layers = []
    prev_pad = emb_pad
    if ft["is_linear"]:
        lay = ft["layers"][0]
        out_dim = lay["w"].shape[1]
        out_pad = _rup(out_dim, LANE)
        ft_layers.append({"w": add_w(lay["w"], rows=prev_pad),
                          "v": add_v([lay["b"]], out_pad), "kind": "final"})
    else:
        for lay in ft["layers"][:-1]:
            width = lay["w"].shape[1]
            wpad = _rup(width, LANE)
            use_bn = lay.get("use_bn", False)
            gamma = lay["gamma"] if use_bn else jnp.ones((width,), jnp.float32)
            beta = lay["beta"] if use_bn else jnp.zeros((width,), jnp.float32)
            mask = jnp.full((width,), 1.0 if use_bn else 0.0, jnp.float32)
            ft_layers.append({"w": add_w(lay["w"], rows=prev_pad),
                              "v": add_v([lay["b"], gamma, beta, mask], wpad),
                              "kind": "hidden",
                              "bn": "all" if use_bn else "none"})
            prev_pad = wpad
        last = ft["layers"][-1]
        out_dim = last["w"].shape[1]
        out_pad = _rup(out_dim, LANE)
        ft_layers.append({"w": add_w(last["w"], rows=prev_pad),
                          "v": add_v([last["b"]], out_pad), "kind": "final"})

    # ---- assemble the two slabs (common lane width, 8-sublane-aligned rows)
    lane_max = max(max(a.shape[1] for a in w_list),
                   max(a.shape[1] for a in v_list))

    w_meta, w_padded, roff = [], [], 0
    for a in w_list:
        rows, cols = a.shape
        rows_p = _rup(rows, 8)
        w_padded.append(_pad2(a, rows_p, lane_max))
        w_meta.append((roff, rows, cols))
        roff += rows_p
    w_slab = jnp.concatenate(w_padded, axis=0)

    v_meta, v_padded, voff = [], [], 0
    for a in v_list:
        cols = a.shape[1]
        v_padded.append(_pad2(a, 8, lane_max))
        v_meta.append((voff, cols))
        voff += 8
    v_slab = jnp.concatenate(v_padded, axis=0)

    plan = {"eps": eps,
            "groups": groups_plan,
            "direct": direct_idx,
            "b_emb": b_emb_idx,
            "finetuner": ft_layers,
            "emb_pad": emb_pad,
            "out_dim": out_dim,
            "out_pad": out_pad,
            "w_meta": tuple(w_meta),
            "v_meta": tuple(v_meta)}
    return plan, w_slab, v_slab


# ----------------------------------------------------------------------------
# The single fused Pallas kernel
# ----------------------------------------------------------------------------
def _fused_encoder_kernel(plan, x_ref, w_ref, v_ref, out_ref):
    eps = plan["eps"]
    w_meta, v_meta = plan["w_meta"], plan["v_meta"]
    x = x_ref[...]

    def matmul(h, widx):
        off, rows, cols = w_meta[widx]
        w = w_ref[off:off + rows, 0:cols]          # static, tile-aligned slice
        return jnp.dot(h, w, preferred_element_type=jnp.float32)

    def run_chain(h, layers):
        for layer in layers:
            voff, vcols = v_meta[layer["v"]]
            h = matmul(h, layer["w"])
            if layer["kind"] == "final":
                h = h + v_ref[voff:voff + 1, 0:vcols]
                continue
            vec = v_ref[voff:voff + 4, 0:vcols]     # bias/gamma/beta/mask
            h = h + vec[0:1, :]
            bn = layer["bn"]
            if bn != "none":
                # BatchNorm1d (training mode): per-batch mean, biased variance
                # one-pass form: var = E[h^2] - mean^2
                mean = jnp.mean(h, axis=0, keepdims=True)
                var = jnp.mean(h * h, axis=0, keepdims=True) - mean * mean
                h_bn = ((h - mean) * jax.lax.rsqrt(var + eps)
                        * vec[1:2, :] + vec[2:3, :])
                if bn == "all":
                    h = h_bn                        # pad cols: gamma=beta=0 -> 0
                else:
                    h = jnp.where(vec[3:4, :] > 0.5, h_bn, h)
            h = jnp.maximum(h, 0.0)
        return h

    # parallel encoder groups -> lane-dense embedding via matmuls (no concat)
    emb = None
    for g in plan["groups"]:
        g_out = run_chain(x, g["layers"])
        d = matmul(g_out, g["assemble"])
        emb = d if emb is None else emb + d
    if plan["direct"] is not None:
        d = matmul(x, plan["direct"])
        emb = d if emb is None else emb + d

    boff, bcols = v_meta[plan["b_emb"]]
    b_emb = v_ref[boff:boff + 1, 0:bcols]
    emb = b_emb if emb is None else emb + b_emb     # single hoisted broadcast

    out = run_chain(emb, plan["finetuner"])
    out_ref[...] = out.astype(out_ref.dtype)


def build_fused_forward(params, eps=1e-5, batch_tile=None):
    """Returns forward(x) running the whole EncoderNetwork in one pallas_call.

    batch_tile=None keeps the full batch in one grid step so training-mode
    BatchNorm statistics exactly match the PyTorch reference.
    """
    plan, w_slab, v_slab = pack_encoder_network(params, eps)
    out_dim, out_pad = plan["out_dim"], plan["out_pad"]
    w_shape, v_shape = w_slab.shape, v_slab.shape

    def forward(x):
        B, din = x.shape
        # TODO(synk): batch_tile < B makes training-mode BatchNorm statistics
        # per-tile (diverges from the reference); use only for eval-mode /
        # no-BN configurations. Default keeps the whole batch in one block.
        tb = B if batch_tile is None else min(batch_tile, B)
        grid = (pl.cdiv(B, tb),)
        out = pl.pallas_call(
            partial(_fused_encoder_kernel, plan),
            out_shape=jax.ShapeDtypeStruct((B, out_pad), jnp.float32),
            grid=grid,
            in_specs=[
                pl.BlockSpec((tb, din), lambda i: (i, 0)),
                pl.BlockSpec(w_shape, lambda i: (0, 0)),   # resident slab
                pl.BlockSpec(v_shape, lambda i: (0, 0)),   # resident slab
            ],
            out_specs=pl.BlockSpec((tb, out_pad), lambda i: (i, 0)),
            compiler_params=pltpu.CompilerParams(
                dimension_semantics=("parallel",)),
        )(x, w_slab, v_slab)
        return out[:, :out_dim]

    return forward


# ----------------------------------------------------------------------------
# Pure-JAX reference (unfused, mirrors the PyTorch module) for correctness
# ----------------------------------------------------------------------------
def _ref_mlp(params, x):
    if params["is_linear"]:
        l = params["layers"][0]
        return x @ l["w"] + l["b"]
    h = x
    for l in params["layers"][:-1]:
        h = h @ l["w"] + l["b"]
        if l["use_bn"]:
            m = jnp.mean(h, axis=0, keepdims=True)
            v = jnp.mean(jnp.square(h - m), axis=0, keepdims=True)
            h = (h - m) * jax.lax.rsqrt(v + 1e-5) * l["gamma"] + l["beta"]
        h = jnp.maximum(h, 0.0)
    last = params["layers"][-1]
    return h @ last["w"] + last["b"]


def _ref_forward(params, x):
    outs = []
    for enc in params["pretrained_encoders"]:
        if "out_layer" in enc:
            h = _ref_mlp(enc["mlp"], x)
            outs.append(h @ enc["out_layer"]["w"] + enc["out_layer"]["b"])
        else:
            outs.append(_ref_mlp(enc, x))
    for enc in params["base_encoders"]:
        outs.append(_ref_mlp(enc, x))
    emb = jnp.concatenate(outs, axis=1)
    return _ref_mlp(params["finetuner_module"], emb)


# ----------------------------------------------------------------------------
if __name__ == "__main__":
    batch, input_dim, hidden_dim = 8, 16, 32

    pkey = jax.random.PRNGKey(42)
    k = jax.random.split(pkey, 6)

    params = {
        "pretrained_encoders": [
            # MLP: 2 layers (linear -> BN -> relu -> linear), output 8
            init_mlp(k[0], num_layers=2, input_dim=input_dim,
                     hidden_dim=hidden_dim, output_dim=8),
            # MLPWrapper: MLP (2 layers, out 12) followed by Linear(12 -> 8)
            init_mlp_wrapper(k[1], out_dim=8, num_layers=2,
                             input_dim=input_dim, hidden_dim=hidden_dim,
                             mlp_output_dim=12),
        ],
        "base_encoders": [
            init_mlp(k[2], num_layers=2, input_dim=input_dim,
                     hidden_dim=hidden_dim, output_dim=8),
            # single-layer MLP exercises the is_linear branch
            init_mlp(k[3], num_layers=1, input_dim=input_dim,
                     hidden_dim=hidden_dim, output_dim=8),
        ],
        # concat dim = 8 + 8 + 8 + 8 = 32
        "finetuner_module": init_mlp(k[4], num_layers=2, input_dim=32,
                                     hidden_dim=hidden_dim, output_dim=10),
    }

    x = jax.random.normal(jax.random.PRNGKey(0), (batch, input_dim),
                          dtype=jnp.float32)

    forward = build_fused_forward(params)
    out = jax.block_until_ready(forward(x))

    ref = _ref_forward(params, x)
    assert out.shape == (batch, 10), out.shape
    assert jnp.allclose(out, ref, atol=1e-4, rtol=1e-4), \
        float(jnp.max(jnp.abs(out - ref)))

    print("KERNEL_OK")
</pallas_src>

<mosaic_0001>
module attributes {stable_mosaic.version = 11 : i64} {
  func.func @_fused_encoder_kernel(%arg0: i32, %arg1: memref<8x16xf32, #tpu.memory_space<vmem>>, %arg2: memref<544x128xf32, #tpu.memory_space<vmem>>, %arg3: memref<40x128xf32, #tpu.memory_space<vmem>>, %arg4: memref<8x128xf32, #tpu.memory_space<vmem>>) attributes {dimension_semantics = [#tpu.dimension_semantics<parallel>], iteration_bounds = array<i64: 1>, scalar_prefetch = 0 : i64, scratch_operands = 0 : i64, tpu.core_type = #tpu.core_type<tc>, window_params = [{transform_indices = @transform_0, window_bounds = array<i64: 8, 16>}, {pipeline_mode = #tpu.pipeline_mode<synchronous>, transform_indices = @transform_1, window_bounds = array<i64: 544, 128>}, {pipeline_mode = #tpu.pipeline_mode<synchronous>, transform_indices = @transform_2, window_bounds = array<i64: 40, 128>}, {transform_indices = @transform_3, window_bounds = array<i64: 8, 128>}]} {
    %c0 = arith.constant 0 : index
    %c0_0 = arith.constant 0 : index
    %0 = vector.load %arg1[%c0, %c0_0] : memref<8x16xf32, #tpu.memory_space<vmem>>, vector<8x16xf32>
    %c0_1 = arith.constant 0 : index
    %c0_2 = arith.constant 0 : index
    %1 = vector.load %arg2[%c0_1, %c0_2] : memref<544x128xf32, #tpu.memory_space<vmem>>, vector<16x128xf32>
    %cst = arith.constant dense<0.000000e+00> : vector<8x128xf32>
    %2 = tpu.matmul %0, %1, %cst {dimension_numbers = #tpu.dot_dimension_numbers<[1], [0], [0], [1], [0, 0, 1, 1], [], []>} : vector<8x16xf32>, vector<16x128xf32>, vector<8x128xf32> -> vector<8x128xf32>
    %c0_3 = arith.constant 0 : index
    %c0_4 = arith.constant 0 : index
    %3 = vector.load %arg3[%c0_3, %c0_4] : memref<40x128xf32, #tpu.memory_space<vmem>>, vector<4x128xf32>
    %4 = vector.extract_strided_slice %3 {offsets = [0, 0], sizes = [1, 128], strides = [1, 1]} : vector<4x128xf32> to vector<1x128xf32>
    %5 = vector.broadcast %4 : vector<1x128xf32> to vector<8x128xf32>
    %6 = arith.addf %2, %5 : vector<8x128xf32>
    %cst_5 = arith.constant dense<0.000000e+00> : vector<128xf32>
    %7 = vector.multi_reduction <add>, %6, %cst_5 [0] : vector<8x128xf32> to vector<128xf32>
    %8 = vector.shape_cast %7 : vector<128xf32> to vector<1x128xf32>
    %cst_6 = arith.constant 8.000000e+00 : f32
    %9 = vector.broadcast %cst_6 : f32 to vector<1x128xf32>
    %10 = arith.divf %8, %9 : vector<1x128xf32>
    %11 = arith.mulf %6, %6 : vector<8x128xf32>
    %cst_7 = arith.constant dense<0.000000e+00> : vector<128xf32>
    %12 = vector.multi_reduction <add>, %11, %cst_7 [0] : vector<8x128xf32> to vector<128xf32>
    %13 = vector.shape_cast %12 : vector<128xf32> to vector<1x128xf32>
    %cst_8 = arith.constant 8.000000e+00 : f32
    %14 = vector.broadcast %cst_8 : f32 to vector<1x128xf32>
    %15 = arith.divf %13, %14 : vector<1x128xf32>
    %16 = arith.mulf %10, %10 : vector<1x128xf32>
    %17 = arith.subf %15, %16 : vector<1x128xf32>
    %18 = vector.broadcast %10 : vector<1x128xf32> to vector<8x128xf32>
    %19 = arith.subf %6, %18 : vector<8x128xf32>
    %cst_9 = arith.constant 9.99999974E-6 : f32
    %20 = vector.broadcast %cst_9 : f32 to vector<1x128xf32>
    %21 = arith.addf %17, %20 : vector<1x128xf32>
    %22 = math.rsqrt %21 : vector<1x128xf32>
    %23 = vector.broadcast %22 : vector<1x128xf32> to vector<8x128xf32>
    %24 = arith.mulf %19, %23 : vector<8x128xf32>
    %25 = vector.extract_strided_slice %3 {offsets = [1, 0], sizes = [1, 128], strides = [1, 1]} : vector<4x128xf32> to vector<1x128xf32>
    %26 = vector.broadcast %25 : vector<1x128xf32> to vector<8x128xf32>
    %27 = arith.mulf %24, %26 : vector<8x128xf32>
    %28 = vector.extract_strided_slice %3 {offsets = [2, 0], sizes = [1, 128], strides = [1, 1]} : vector<4x128xf32> to vector<1x128xf32>
    %29 = vector.broadcast %28 : vector<1x128xf32> to vector<8x128xf32>
    %30 = arith.addf %27, %29 : vector<8x128xf32>
    %cst_10 = arith.constant 0.000000e+00 : f32
    %31 = vector.broadcast %cst_10 : f32 to vector<8x128xf32>
    %32 = arith.maximumf %30, %31 : vector<8x128xf32>
    %c16 = arith.constant 16 : index
    %c0_11 = arith.constant 0 : index
    %33 = vector.load %arg2[%c16, %c0_11] : memref<544x128xf32, #tpu.memory_space<vmem>>, vector<128x128xf32>
    %cst_12 = arith.constant dense<0.000000e+00> : vector<8x128xf32>
    %34 = tpu.matmul %32, %33, %cst_12 {dimension_numbers = #tpu.dot_dimension_numbers<[1], [0], [0], [1], [0, 0, 1, 1], [], []>} : vector<8x128xf32>, vector<128x128xf32>, vector<8x128xf32> -> vector<8x128xf32>
    %c8 = arith.constant 8 : index
    %c0_13 = arith.constant 0 : index
    %35 = vector.load %arg3[%c8, %c0_13] : memref<40x128xf32, #tpu.memory_space<vmem>>, vector<1x128xf32>
    %36 = vector.broadcast %35 : vector<1x128xf32> to vector<8x128xf32>
    %37 = arith.addf %34, %36 : vector<8x128xf32>
    %c144 = arith.constant 144 : index
    %c0_14 = arith.constant 0 : index
    %38 = vector.load %arg2[%c144, %c0_14] : memref<544x128xf32, #tpu.memory_space<vmem>>, vector<128x128xf32>
    %cst_15 = arith.constant dense<0.000000e+00> : vector<8x128xf32>
    %39 = tpu.matmul %37, %38, %cst_15 {dimension_numbers = #tpu.dot_dimension_numbers<[1], [0], [0], [1], [0, 0, 1, 1], [], []>} : vector<8x128xf32>, vector<128x128xf32>, vector<8x128xf32> -> vector<8x128xf32>
    %c272 = arith.constant 272 : index
    %c0_16 = arith.constant 0 : index
    %40 = vector.load %arg2[%c272, %c0_16] : memref<544x128xf32, #tpu.memory_space<vmem>>, vector<16x128xf32>
    %cst_17 = arith.constant dense<0.000000e+00> : vector<8x128xf32>
    %41 = tpu.matmul %0, %40, %cst_17 {dimension_numbers = #tpu.dot_dimension_numbers<[1], [0], [0], [1], [0, 0, 1, 1], [], []>} : vector<8x16xf32>, vector<16x128xf32>, vector<8x128xf32> -> vector<8x128xf32>
    %42 = arith.addf %39, %41 : vector<8x128xf32>
    %c16_18 = arith.constant 16 : index
    %c0_19 = arith.constant 0 : index
    %43 = vector.load %arg3[%c16_18, %c0_19] : memref<40x128xf32, #tpu.memory_space<vmem>>, vector<1x128xf32>
    %44 = vector.broadcast %43 : vector<1x128xf32> to vector<8x128xf32>
    %45 = arith.addf %42, %44 : vector<8x128xf32>
    %c288 = arith.constant 288 : index
    %c0_20 = arith.constant 0 : index
    %46 = vector.load %arg2[%c288, %c0_20] : memref<544x128xf32, #tpu.memory_space<vmem>>, vector<128x128xf32>
    %cst_21 = arith.constant dense<0.000000e+00> : vector<8x128xf32>
    %47 = tpu.matmul %45, %46, %cst_21 {dimension_numbers = #tpu.dot_dimension_numbers<[1], [0], [0], [1], [0, 0, 1, 1], [], []>} : vector<8x128xf32>, vector<128x128xf32>, vector<8x128xf32> -> vector<8x128xf32>
    %c24 = arith.constant 24 : index
    %c0_22 = arith.constant 0 : index
    %48 = vector.load %arg3[%c24, %c0_22] : memref<40x128xf32, #tpu.memory_space<vmem>>, vector<4x128xf32>
    %49 = vector.extract_strided_slice %48 {offsets = [0, 0], sizes = [1, 128], strides = [1, 1]} : vector<4x128xf32> to vector<1x128xf32>
    %50 = vector.broadcast %49 : vector<1x128xf32> to vector<8x128xf32>
    %51 = arith.addf %47, %50 : vector<8x128xf32>
    %cst_23 = arith.constant dense<0.000000e+00> : vector<128xf32>
    %52 = vector.multi_reduction <add>, %51, %cst_23 [0] : vector<8x128xf32> to vector<128xf32>
    %53 = vector.shape_cast %52 : vector<128xf32> to vector<1x128xf32>
    %cst_24 = arith.constant 8.000000e+00 : f32
    %54 = vector.broadcast %cst_24 : f32 to vector<1x128xf32>
    %55 = arith.divf %53, %54 : vector<1x128xf32>
    %56 = arith.mulf %51, %51 : vector<8x128xf32>
    %cst_25 = arith.constant dense<0.000000e+00> : vector<128xf32>
    %57 = vector.multi_reduction <add>, %56, %cst_25 [0] : vector<8x128xf32> to vector<128xf32>
    %58 = vector.shape_cast %57 : vector<128xf32> to vector<1x128xf32>
    %cst_26 = arith.constant 8.000000e+00 : f32
    %59 = vector.broadcast %cst_26 : f32 to vector<1x128xf32>
    %60 = arith.divf %58, %59 : vector<1x128xf32>
    %61 = arith.mulf %55, %55 : vector<1x128xf32>
    %62 = arith.subf %60, %61 : vector<1x128xf32>
    %63 = vector.broadcast %55 : vector<1x128xf32> to vector<8x128xf32>
    %64 = arith.subf %51, %63 : vector<8x128xf32>
    %cst_27 = arith.constant 9.99999974E-6 : f32
    %65 = vector.broadcast %cst_27 : f32 to vector<1x128xf32>
    %66 = arith.addf %62, %65 : vector<1x128xf32>
    %67 = math.rsqrt %66 : vector<1x128xf32>
    %68 = vector.broadcast %67 : vector<1x128xf32> to vector<8x128xf32>
    %69 = arith.mulf %64, %68 : vector<8x128xf32>
    %70 = vector.extract_strided_slice %48 {offsets = [1, 0], sizes = [1, 128], strides = [1, 1]} : vector<4x128xf32> to vector<1x128xf32>
    %71 = vector.broadcast %70 : vector<1x128xf32> to vector<8x128xf32>
    %72 = arith.mulf %69, %71 : vector<8x128xf32>
    %73 = vector.extract_strided_slice %48 {offsets = [2, 0], sizes = [1, 128], strides = [1, 1]} : vector<4x128xf32> to vector<1x128xf32>
    %74 = vector.broadcast %73 : vector<1x128xf32> to vector<8x128xf32>
    %75 = arith.addf %72, %74 : vector<8x128xf32>
    %cst_28 = arith.constant 0.000000e+00 : f32
    %76 = vector.broadcast %cst_28 : f32 to vector<8x128xf32>
    %77 = arith.maximumf %75, %76 : vector<8x128xf32>
    %c416 = arith.constant 416 : index
    %c0_29 = arith.constant 0 : index
    %78 = vector.load %arg2[%c416, %c0_29] : memref<544x128xf32, #tpu.memory_space<vmem>>, vector<128x128xf32>
    %cst_30 = arith.constant dense<0.000000e+00> : vector<8x128xf32>
    %79 = tpu.matmul %77, %78, %cst_30 {dimension_numbers = #tpu.dot_dimension_numbers<[1], [0], [0], [1], [0, 0, 1, 1], [], []>} : vector<8x128xf32>, vector<128x128xf32>, vector<8x128xf32> -> vector<8x128xf32>
    %c32 = arith.constant 32 : index
    %c0_31 = arith.constant 0 : index
    %80 = vector.load %arg3[%c32, %c0_31] : memref<40x128xf32, #tpu.memory_space<vmem>>, vector<1x128xf32>
    %81 = vector.broadcast %80 : vector<1x128xf32> to vector<8x128xf32>
    %82 = arith.addf %79, %81 : vector<8x128xf32>
    %c0_32 = arith.constant 0 : index
    %c0_33 = arith.constant 0 : index
    %83 = vector.load %arg4[%c0_32, %c0_33] : memref<8x128xf32, #tpu.memory_space<vmem>>, vector<8x128xf32>
    tpu.vector_store %arg4[%c0_32, %c0_33], %82 {strides = array<i32>} : memref<8x128xf32, #tpu.memory_space<vmem>>, vector<8x128xf32>,
    return
  }
  func.func @transform_0(%arg0: i32) -> (i32, i32) {
    %c0_i32 = arith.constant 0 : i32
    %c0_i32_0 = arith.constant 0 : i32
    return %arg0, %c0_i32 : i32, i32
  }
  func.func @transform_1(%arg0: i32) -> (i32, i32) {
    %c0_i32 = arith.constant 0 : i32
    %c0_i32_0 = arith.constant 0 : i32
    %c0_i32_1 = arith.constant 0 : i32
    return %c0_i32, %c0_i32_0 : i32, i32
  }
  func.func @transform_2(%arg0: i32) -> (i32, i32) {
    %c0_i32 = arith.constant 0 : i32
    %c0_i32_0 = arith.constant 0 : i32
    %c0_i32_1 = arith.constant 0 : i32
    return %c0_i32, %c0_i32_0 : i32, i32
  }
  func.func @transform_3(%arg0: i32) -> (i32, i32) {
    %c0_i32 = arith.constant 0 : i32
    %c0_i32_0 = arith.constant 0 : i32
    return %arg0, %c0_i32 : i32, i32
  }
}

</mosaic_0001>

<llo_original>
// kernel: tpu_custom_call.1
$region0: #{tpu_custom_call.1}
  #allocation0 [shape = 'u32[]', space=smem, size = 0x4, offset = 0x4, fixed_abs, tag = 'smem constant byte address 0x4 - core index']
  #allocation1 [shape = 'u32[144,128]{1,0:T(1,128)}', space=vmem, size = 0x12000, scoped, tag = 'internal scratch']
  %s0 = inlined_call_operand.hbm [shape: f32[8,16], index: 0, kind: input, shape index: {}]
  %s1 = inlined_call_operand.hbm [shape: f32[544,128], index: 1, kind: input, shape index: {}]
  %s2 = inlined_call_operand.hbm [shape: f32[40,128], index: 2, kind: input, shape index: {}]
  %s3 = inlined_call_operand.hbm [shape: f32[8,128], index: 3, kind: output, shape index: {}]
  %s4 = sld [smem:[#allocation0]]
  $region34: #{tpu_custom_call.1} parent=0
    _
  %s6 = ssub.s32 1, %s4
  %s7 = scalar_select 0, %s6, %s4
  $region1: #{tpu_custom_call.1} parent=0
    #allocation2 [shape = 'u8[4096]{0}', space=vmem, size = 0x1000, scoped, tag = 'input window, operand 0, single buffered']
    #allocation3 [shape = 's32[1]{0}', space=sflag, size = 0x4, scoped, tag = 'scoped memory for tpu_custom_call.1']
    #allocation4 [shape = 's32[1]{0}', space=sflag, size = 0x4, scoped, tag = 'scoped memory for tpu_custom_call.1']
    #allocation5 [shape = 'u8[278528]{0}', space=vmem, size = 0x44000, scoped, tag = 'input window, operand 1, single buffered']
    #allocation6 [shape = 's32[1]{0}', space=sflag, size = 0x4, scoped, tag = 'scoped memory for tpu_custom_call.1']
    #allocation7 [shape = 'u8[20480]{0}', space=vmem, size = 0x5000, scoped, tag = 'input window, operand 2, single buffered']
    #allocation8 [shape = 'u8[4096]{0}', space=vmem, size = 0x1000, scoped, tag = 'output window, operand 0, single buffered']
    %8 = vsyncpa [#allocation3], 0
    %9 = vsyncpa [#allocation6], 0
    %10 = vsyncpa [#allocation4], 0
    // Predicated region
    $region2: #{tpu_custom_call.1} parent=1 // pred_check
      _
    $region3: #{tpu_custom_call.1} parent=1 // pred_check_branch
      %12 = sbr.rel (0) target = $region5
    $region4: #{tpu_custom_call.1} parent=1 // pred_region
      %s14 = ssub.s32 128, 128
      %15 = vsyncadd [#allocation3], %s14
      %s17 = sshll.u32 [#allocation2], 4
      %s18 = int_to_ptr.vmem [resolvable:$true] %s17
      %20 = dma.hbm_to_vmem [thread:$0]  %s0, 128, %s18, [#allocation3]
    $region5: #{tpu_custom_call.1} parent=1 // pred_fallthru
      _
    // Predicated region
    $region6: #{tpu_custom_call.1} parent=1 // pred_check
      _
    $region7: #{tpu_custom_call.1} parent=1 // pred_check_branch
      %22 = sbr.rel (0) target = $region9
    $region8: #{tpu_custom_call.1} parent=1 // pred_region
      %s24 = ssub.s32 8704, 8704
      %25 = vsyncadd [#allocation6], %s24
      %s26 = sshll.u32 [#allocation5], 4
      %s27 = int_to_ptr.vmem [resolvable:$true] %s26
      %32 = dma.hbm_to_vmem [thread:$0]  %s1, 8704, %s27, [#allocation6], 128, 128, 8
    $region9: #{tpu_custom_call.1} parent=1 // pred_fallthru
      _
    // Predicated region
    $region10: #{tpu_custom_call.1} parent=1 // pred_check
      _
    $region11: #{tpu_custom_call.1} parent=1 // pred_check_branch
      %34 = sbr.rel (0) target = $region13
    $region12: #{tpu_custom_call.1} parent=1 // pred_region
      %s36 = ssub.s32 640, 640
      %37 = vsyncadd [#allocation6], %s36
      %s38 = sshll.u32 [#allocation7], 4
      %s39 = int_to_ptr.vmem [resolvable:$true] %s38
      %44 = dma.hbm_to_vmem [thread:$0]  %s2, 640, %s39, [#allocation6], 128, 128, 8
    $region13: #{tpu_custom_call.1} parent=1 // pred_fallthru
      _
    // Predicated region
    $region14: #{tpu_custom_call.1} parent=1 // pred_check
      _
    $region15: #{tpu_custom_call.1} parent=1 // pred_check_branch
      %46 = sbr.rel (0) target = $region17
    $region16: #{tpu_custom_call.1} parent=1 // pred_region
      %47 = dma.done [#allocation3], 128
    $region17: #{tpu_custom_call.1} parent=1 // pred_fallthru
      _
    // Predicated region
    $region18: #{tpu_custom_call.1} parent=1 // pred_check
      _
    $region19: #{tpu_custom_call.1} parent=1 // pred_check_branch
      %49 = sbr.rel (0) target = $region21
    $region20: #{tpu_custom_call.1} parent=1 // pred_region
      %50 = dma.done [#allocation6], 8704
    $region21: #{tpu_custom_call.1} parent=1 // pred_fallthru
      _
    // Predicated region
    $region22: #{tpu_custom_call.1} parent=1 // pred_check
      _
    $region23: #{tpu_custom_call.1} parent=1 // pred_check_branch
      %52 = sbr.rel (0) target = $region25
    $region24: #{tpu_custom_call.1} parent=1 // pred_region
      %53 = dma.done [#allocation6], 640
    $region25: #{tpu_custom_call.1} parent=1 // pred_fallthru
      _
    %v54 = vld [vmem:[#allocation2] sm:$0xff]
    %v55 = vld [vmem:[#allocation5] sm:$0xff]
    %v56 = vld [vmem:[#allocation5 + $0x8] sm:$0xff]
    %v57 = vld [vmem:[#allocation7] sm:$0xf]
    %v58 = vlaneseq
    %v59 = vshrl.u32 %v58, 7
    %v60 = vsub.s32 0, %v59
    %v61 = vrot.slane %v57, %v60
    %vm62 = vcmask 130048
    %v64 = vsel %vm62, %v54, 0
    %66 = vmatprep.subr.mxu0 0.0
    %67 = vmatpush1.msra.mxu0 0.0
    %68 = vmatprep.subr.mxu0 0.0
    %69 = vmatpush1.msra.mxu0 0.0
    %70 = vmatprep.subr.mxu0 0.0
    %71 = vmatpush1.msra.mxu0 0.0
    %72 = vmatprep.subr.mxu0 0.0
    %73 = vmatpush1.msra.mxu0 0.0
    %74 = vmatprep.subr.mxu0 0.0
    %75 = vmatpush1.msra.mxu0 0.0
    %76 = vmatprep.subr.mxu0 0.0
    %77 = vmatpush1.msra.mxu0 0.0
    %78 = vmatprep.subr.mxu0 0.0
    %79 = vmatpush1.msra.mxu0 0.0
    %80 = vmatprep.subr.mxu0 0.0
    %81 = vmatpush1.msra.mxu0 0.0
    %82 = vmatprep.subr.mxu0 0.0
    %83 = vmatpush1.msra.mxu0 0.0
    %84 = vmatprep.subr.mxu0 0.0
    %85 = vmatpush1.msra.mxu0 0.0
    %86 = vmatprep.subr.mxu0 0.0
    %87 = vmatpush1.msra.mxu0 0.0
    %88 = vmatprep.subr.mxu0 0.0
    %89 = vmatpush1.msra.mxu0 0.0
    %90 = vmatprep.subr.mxu0 0.0
    %91 = vmatpush1.msra.mxu0 0.0
    %92 = vmatprep.subr.mxu0 0.0
    %93 = vmatpush1.msra.mxu0 0.0
    %94 = vmatprep.subr.mxu0 0.0
    %95 = vmatpush1.msra.mxu0 %v56
    %96 = vmatprep.subr.mxu0 0.0
    %97 = vmatpush1.msra.mxu0 %v55
    %98 = vmatprep.subr.mxu0 0.0
    %99 = vmatpush2.msra.mxu0 0.0
    %100 = vmatprep.subr.mxu0 0.0
    %101 = vmatpush2.msra.mxu0 0.0
    %102 = vmatprep.subr.mxu0 0.0
    %103 = vmatpush2.msra.mxu0 0.0
    %104 = vmatprep.subr.mxu0 0.0
    %105 = vmatpush2.msra.mxu0 0.0
    %106 = vmatprep.subr.mxu0 0.0
    %107 = vmatpush2.msra.mxu0 0.0
    %108 = vmatprep.subr.mxu0 0.0
    %109 = vmatpush2.msra.mxu0 0.0
    %110 = vmatprep.subr.mxu0 0.0
    %111 = vmatpush2.msra.mxu0 0.0
    %112 = vmatprep.subr.mxu0 0.0
    %113 = vmatpush2.msra.mxu0 0.0
    %114 = vmatprep.subr.mxu0 0.0
    %115 = vmatpush2.msra.mxu0 0.0
    %116 = vmatprep.subr.mxu0 0.0
    %117 = vmatpush2.msra.mxu0 0.0
    %118 = vmatprep.subr.mxu0 0.0
    %119 = vmatpush2.msra.mxu0 0.0
    %120 = vmatprep.subr.mxu0 0.0
    %121 = vmatpush2.msra.mxu0 0.0
    %122 = vmatprep.subr.mxu0 0.0
    %123 = vmatpush2.msra.mxu0 0.0
    %124 = vmatprep.subr.mxu0 0.0
    %125 = vmatpush2.msra.mxu0 0.0
    %126 = vmatprep.subr.mxu0 0.0
    %127 = vmatpush2.msra.mxu0 0.0
    %128 = vmatprep.subr.mxu0 0.0
    %129 = vmatpush2.msra.mxu0 0.0
    %130 = vmatprep.mubr.f32.mxu0 0.0
    %131 = vmatmul.mubr.f32.gmra.mxu0 %v64
    %v132 = vpop.f32.mrf.mxu0
    %v133 = vadd.f32 %v61, %v132
    %v134 = vpop.f32.mrf.mxu0
    %135 = vdwg.mxu0
    %v136 = vrot.slane %v133, 4
    %v137 = vadd.f32 %v133, %v136
    %v138 = vrot.slane %v137, 2
    %v139 = vadd.f32 %v137, %v138
    %v140 = vrot.slane %v139, 1
    %v141 = vadd.f32 %v139, %v140
    %v142 = vrcp.pop 8.0
    %v143 = vmul.f32 %v141, %v142
    %v144 = vmul.f32 %v133, %v133
    %v145 = vrot.slane %v144, 4
    %v146 = vadd.f32 %v144, %v145
    %v147 = vrot.slane %v146, 2
    %v148 = vadd.f32 %v146, %v147
    %v149 = vrot.slane %v148, 1
    %v150 = vadd.f32 %v148, %v149
    %v151 = vmul.f32 %v150, %v142
    %v152 = vmul.f32 %v143, %v143
    %v153 = vsub.f32 %v151, %v152
    %v154 = vsub.f32 %v133, %v143
    %v155 = vadd.f32 %v153, 1e-05
    %v156 = vrsqrt.pop %v155
    %v157 = vmul.f32 %v154, %v156
    %v158 = vlaneseq
    %v159 = vshrl.u32 %v158, 7
    %v160 = vsub.s32 1, %v159
    %v161 = vrot.slane %v57, %v160
    %v162 = vmul.f32 %v157, %v161
    %v163 = vlaneseq
    %v164 = vshrl.u32 %v163, 7
    %v165 = vsub.s32 2, %v164
    %v166 = vrot.slane %v57, %v165
    %v167 = vadd.f32 %v162, %v166
    %v168 = vmax.f32 %v167, 0.0
    %v169 = vld [vmem:[#allocation5 + $0x10] sm:$0xff]
    %v170 = vld [vmem:[#allocation5 + $0x18] sm:$0xff]
    %v171 = vld [vmem:[#allocation5 + $0x20] sm:$0xff]
    %v172 = vld [vmem:[#allocation5 + $0x28] sm:$0xff]
    %v173 = vld [vmem:[#allocation5 + $0x30] sm:$0xff]
    %v174 = vld [vmem:[#allocation5 + $0x38] sm:$0xff]
    %v175 = vld [vmem:[#allocation5 + $0x40] sm:$0xff]
    %v176 = vld [vmem:[#allocation5 + $0x48] sm:$0xff]
    %v177 = vld [vmem:[#allocation5 + $0x50] sm:$0xff]
    %v178 = vld [vmem:[#allocation5 + $0x58] sm:$0xff]
    %v179 = vld [vmem:[#allocation5 + $0x60] sm:$0xff]
    %v180 = vld [vmem:[#allocation5 + $0x68] sm:$0xff]
    %v181 = vld [vmem:[#allocation5 + $0x70] sm:$0xff]
    %v182 = vld [vmem:[#allocation5 + $0x78] sm:$0xff]
    %v183 = vld [vmem:[#allocation5 + $0x80] sm:$0xff]
    %v184 = vld [vmem:[#allocation5 + $0x88] sm:$0xff]
    %v185 = vld [vmem:[#allocation7 + $0x8] sm:$0x1]
    %v186 = vlaneseq
    %v187 = vshrl.u32 %v186, 7
    %v188 = vsub.s32 0, %v187
    %v189 = vrot.slane %v185, %v188
    %190 = vmatprep.subr.mxu0 0.0
    %191 = vmatpush1.msra.mxu0 %v184
    %192 = vmatprep.subr.mxu0 0.0
    %193 = vmatpush1.msra.mxu0 %v183
    %194 = vmatprep.subr.mxu0 0.0
    %195 = vmatpush1.msra.mxu0 %v182
    %196 = vmatprep.subr.mxu0 0.0
    %197 = vmatpush1.msra.mxu0 %v181
    %198 = vmatprep.subr.mxu0 0.0
    %199 = vmatpush1.msra.mxu0 %v180
    %200 = vmatprep.subr.mxu0 0.0
    %201 = vmatpush1.msra.mxu0 %v179
    %202 = vmatprep.subr.mxu0 0.0
    %203 = vmatpush1.msra.mxu0 %v178
    %204 = vmatprep.subr.mxu0 0.0
    %205 = vmatpush1.msra.mxu0 %v177
    %206 = vmatprep.subr.mxu0 0.0
    %207 = vmatpush1.msra.mxu0 %v176
    %208 = vmatprep.subr.mxu0 0.0
    %209 = vmatpush1.msra.mxu0 %v175
    %210 = vmatprep.subr.mxu0 0.0
    %211 = vmatpush1.msra.mxu0 %v174
    %212 = vmatprep.subr.mxu0 0.0
    %213 = vmatpush1.msra.mxu0 %v173
    %214 = vmatprep.subr.mxu0 0.0
    %215 = vmatpush1.msra.mxu0 %v172
    %216 = vmatprep.subr.mxu0 0.0
    %217 = vmatpush1.msra.mxu0 %v171
    %218 = vmatprep.subr.mxu0 0.0
    %219 = vmatpush1.msra.mxu0 %v170
    %220 = vmatprep.subr.mxu0 0.0
    %221 = vmatpush1.msra.mxu0 %v169
    %222 = vmatprep.subr.mxu0 0.0
    %223 = vmatpush2.msra.mxu0 0.0
    %224 = vmatprep.subr.mxu0 0.0
    %225 = vmatpush2.msra.mxu0 0.0
    %226 = vmatprep.subr.mxu0 0.0
    %227 = vmatpush2.msra.mxu0 0.0
    %228 = vmatprep.subr.mxu0 0.0
    %229 = vmatpush2.msra.mxu0 0.0
    %230 = vmatprep.subr.mxu0 0.0
    %231 = vmatpush2.msra.mxu0 0.0
    %232 = vmatprep.subr.mxu0 0.0
    %233 = vmatpush2.msra.mxu0 0.0
    %234 = vmatprep.subr.mxu0 0.0
    %235 = vmatpush2.msra.mxu0 0.0
    %236 = vmatprep.subr.mxu0 0.0
    %237 = vmatpush2.msra.mxu0 0.0
    %238 = vmatprep.subr.mxu0 0.0
    %239 = vmatpush2.msra.mxu0 0.0
    %240 = vmatprep.subr.mxu0 0.0
    %241 = vmatpush2.msra.mxu0 0.0
    %242 = vmatprep.subr.mxu0 0.0
    %243 = vmatpush2.msra.mxu0 0.0
    %244 = vmatprep.subr.mxu0 0.0
    %245 = vmatpush2.msra.mxu0 0.0
    %246 = vmatprep.subr.mxu0 0.0
    %247 = vmatpush2.msra.mxu0 0.0
    %248 = vmatprep.subr.mxu0 0.0
    %249 = vmatpush2.msra.mxu0 0.0
    %250 = vmatprep.subr.mxu0 0.0
    %251 = vmatpush2.msra.mxu0 0.0
    %252 = vmatprep.subr.mxu0 0.0
    %253 = vmatpush2.msra.mxu0 0.0
    %254 = vmatprep.mubr.f32.mxu0 0.0
    %255 = vmatmul.mubr.f32.gmra.mxu0 %v168
    %v256 = vpop.f32.mrf.mxu0
    %v257 = vadd.f32 %v189, %v256
    %v258 = vpop.f32.mrf.mxu0
    %259 = vdwg.mxu0
    %v260 = vld [vmem:[#allocation5 + $0x90] sm:$0xff]
    %v261 = vld [vmem:[#allocation5 + $0x98] sm:$0xff]
    %v262 = vld [vmem:[#allocation5 + $0xa0] sm:$0xff]
    %v263 = vld [vmem:[#allocation5 + $0xa8] sm:$0xff]
    %v264 = vld [vmem:[#allocation5 + $0xb0] sm:$0xff]
    %v265 = vld [vmem:[#allocation5 + $0xb8] sm:$0xff]
    %v266 = vld [vmem:[#allocation5 + $0xc0] sm:$0xff]
    %v267 = vld [vmem:[#allocation5 + $0xc8] sm:$0xff]
    %v268 = vld [vmem:[#allocation5 + $0xd0] sm:$0xff]
    %v269 = vld [vmem:[#allocation5 + $0xd8] sm:$0xff]
    %v270 = vld [vmem:[#allocation5 + $0xe0] sm:$0xff]
    %v271 = vld [vmem:[#allocation5 + $0xe8] sm:$0xff]
    %v272 = vld [vmem:[#allocation5 + $0xf0] sm:$0xff]
    %v273 = vld [vmem:[#allocation5 + $0xf8] sm:$0xff]
    %v274 = vld [vmem:[#allocation5 + $0x100] sm:$0xff]
    %v275 = vld [vmem:[#allocation5 + $0x108] sm:$0xff]
    %v276 = vld [vmem:[#allocation5 + $0x110] sm:$0xff]
    %v277 = vld [vmem:[#allocation5 + $0x118] sm:$0xff]
    %278 = vmatprep.subr.mxu0 0.0
    %279 = vmatpush1.msra.mxu0 0.0
    %280 = vmatprep.subr.mxu0 0.0
    %281 = vmatpush1.msra.mxu0 0.0
    %282 = vmatprep.subr.mxu0 0.0
    %283 = vmatpush1.msra.mxu0 0.0
    %284 = vmatprep.subr.mxu0 0.0
    %285 = vmatpush1.msra.mxu0 0.0
    %286 = vmatprep.subr.mxu0 0.0
    %287 = vmatpush1.msra.mxu0 0.0
    %288 = vmatprep.subr.mxu0 0.0
    %289 = vmatpush1.msra.mxu0 0.0
    %290 = vmatprep.subr.mxu0 0.0
    %291 = vmatpush1.msra.mxu0 0.0
    %292 = vmatprep.subr.mxu0 0.0
    %293 = vmatpush1.msra.mxu0 0.0
    %294 = vmatprep.subr.mxu0 0.0
    %295 = vmatpush1.msra.mxu0 0.0
    %296 = vmatprep.subr.mxu0 0.0
    %297 = vmatpush1.msra.mxu0 0.0
    %298 = vmatprep.subr.mxu0 0.0
    %299 = vmatpush1.msra.mxu0 0.0
    %300 = vmatprep.subr.mxu0 0.0
    %301 = vmatpush1.msra.mxu0 0.0
    %302 = vmatprep.subr.mxu0 0.0
    %303 = vmatpush1.msra.mxu0 0.0
    %304 = vmatprep.subr.mxu0 0.0
    %305 = vmatpush1.msra.mxu0 0.0
    %306 = vmatprep.subr.mxu0 0.0
    %307 = vmatpush1.msra.mxu0 %v277
    %308 = vmatprep.subr.mxu0 0.0
    %309 = vmatpush1.msra.mxu0 %v276
    %310 = vmatprep.subr.mxu0 0.0
    %311 = vmatpush2.msra.mxu0 0.0
    %312 = vmatprep.subr.mxu0 0.0
    %313 = vmatpush2.msra.mxu0 0.0
    %314 = vmatprep.subr.mxu0 0.0
    %315 = vmatpush2.msra.mxu0 0.0
    %316 = vmatprep.subr.mxu0 0.0
    %317 = vmatpush2.msra.mxu0 0.0
    %318 = vmatprep.subr.mxu0 0.0
    %319 = vmatpush2.msra.mxu0 0.0
    %320 = vmatprep.subr.mxu0 0.0
    %321 = vmatpush2.msra.mxu0 0.0
    %322 = vmatprep.subr.mxu0 0.0
    %323 = vmatpush2.msra.mxu0 0.0
    %324 = vmatprep.subr.mxu0 0.0
    %325 = vmatpush2.msra.mxu0 0.0
    %326 = vmatprep.subr.mxu0 0.0
    %327 = vmatpush2.msra.mxu0 0.0
    %328 = vmatprep.subr.mxu0 0.0
    %329 = vmatpush2.msra.mxu0 0.0
    %330 = vmatprep.subr.mxu0 0.0
    %331 = vmatpush2.msra.mxu0 0.0
    %332 = vmatprep.subr.mxu0 0.0
    %333 = vmatpush2.msra.mxu0 0.0
    %334 = vmatprep.subr.mxu0 0.0
    %335 = vmatpush2.msra.mxu0 0.0
    %336 = vmatprep.subr.mxu0 0.0
    %337 = vmatpush2.msra.mxu0 0.0
    %338 = vmatprep.subr.mxu0 0.0
    %339 = vmatpush2.msra.mxu0 0.0
    %340 = vmatprep.subr.mxu0 0.0
    %341 = vmatpush2.msra.mxu0 0.0
    %342 = vmatprep.mubr.f32.mxu0 0.0
    %343 = vmatmul.mubr.f32.gmra.mxu0 %v64
    %v344 = vpop.f32.mrf.mxu0
    %v345 = vadd.f32 0.0, %v344
    %v346 = vpop.f32.mrf.mxu0
    %347 = vdwg.mxu0
    %348 = vmatprep.subr.mxu0 0.0
    %349 = vmatpush1.msra.mxu0 %v275
    %350 = vmatprep.subr.mxu0 0.0
    %351 = vmatpush1.msra.mxu0 %v274
    %352 = vmatprep.subr.mxu0 0.0
    %353 = vmatpush1.msra.mxu0 %v273
    %354 = vmatprep.subr.mxu0 0.0
    %355 = vmatpush1.msra.mxu0 %v272
    %356 = vmatprep.subr.mxu0 0.0
    %357 = vmatpush1.msra.mxu0 %v271
    %358 = vmatprep.subr.mxu0 0.0
    %359 = vmatpush1.msra.mxu0 %v270
    %360 = vmatprep.subr.mxu0 0.0
    %361 = vmatpush1.msra.mxu0 %v269
    %362 = vmatprep.subr.mxu0 0.0
    %363 = vmatpush1.msra.mxu0 %v268
    %364 = vmatprep.subr.mxu0 0.0
    %365 = vmatpush1.msra.mxu0 %v267
    %366 = vmatprep.subr.mxu0 0.0
    %367 = vmatpush1.msra.mxu0 %v266
    %368 = vmatprep.subr.mxu0 0.0
    %369 = vmatpush1.msra.mxu0 %v265
    %370 = vmatprep.subr.mxu0 0.0
    %371 = vmatpush1.msra.mxu0 %v264
    %372 = vmatprep.subr.mxu0 0.0
    %373 = vmatpush1.msra.mxu0 %v263
    %374 = vmatprep.subr.mxu0 0.0
    %375 = vmatpush1.msra.mxu0 %v262
    %376 = vmatprep.subr.mxu0 0.0
    %377 = vmatpush1.msra.mxu0 %v261
    %378 = vmatprep.subr.mxu0 0.0
    %379 = vmatpush1.msra.mxu0 %v260
    %380 = vmatprep.subr.mxu0 0.0
    %381 = vmatpush2.msra.mxu0 0.0
    %382 = vmatprep.subr.mxu0 0.0
    %383 = vmatpush2.msra.mxu0 0.0
    %384 = vmatprep.subr.mxu0 0.0
    %385 = vmatpush2.msra.mxu0 0.0
    %386 = vmatprep.subr.mxu0 0.0
    %387 = vmatpush2.msra.mxu0 0.0
    %388 = vmatprep.subr.mxu0 0.0
    %389 = vmatpush2.msra.mxu0 0.0
    %390 = vmatprep.subr.mxu0 0.0
    %391 = vmatpush2.msra.mxu0 0.0
    %392 = vmatprep.subr.mxu0 0.0
    %393 = vmatpush2.msra.mxu0 0.0
    %394 = vmatprep.subr.mxu0 0.0
    %395 = vmatpush2.msra.mxu0 0.0
    %396 = vmatprep.subr.mxu0 0.0
    %397 = vmatpush2.msra.mxu0 0.0
    %398 = vmatprep.subr.mxu0 0.0
    %399 = vmatpush2.msra.mxu0 0.0
    %400 = vmatprep.subr.mxu0 0.0
    %401 = vmatpush2.msra.mxu0 0.0
    %402 = vmatprep.subr.mxu0 0.0
    %403 = vmatpush2.msra.mxu0 0.0
    %404 = vmatprep.subr.mxu0 0.0
    %405 = vmatpush2.msra.mxu0 0.0
    %406 = vmatprep.subr.mxu0 0.0
    %407 = vmatpush2.msra.mxu0 0.0
    %408 = vmatprep.subr.mxu0 0.0
    %409 = vmatpush2.msra.mxu0 0.0
    %410 = vmatprep.subr.mxu0 0.0
    %411 = vmatpush2.msra.mxu0 0.0
    %412 = vmatprep.mubr.f32.mxu0 0.0
    %413 = vmatmul.mubr.f32.gmra.mxu0 %v257
    %v414 = vpop.f32.mrf.mxu0
    %v415 = vadd.f32 %v345, %v414
    %v416 = vpop.f32.mrf.mxu0
    %417 = vdwg.mxu0
    %v418 = vld [vmem:[#allocation7 + $0x10] sm:$0x1]
    %v419 = vlaneseq
    %v420 = vshrl.u32 %v419, 7
    %v421 = vsub.s32 0, %v420
    %v422 = vrot.slane %v418, %v421
    %v423 = vadd.f32 %v415, %v422
    %v424 = vld [vmem:[#allocation5 + $0x120] sm:$0xff]
    %v425 = vld [vmem:[#allocation5 + $0x128] sm:$0xff]
    %v426 = vld [vmem:[#allocation5 + $0x130] sm:$0xff]
    %v427 = vld [vmem:[#allocation5 + $0x138] sm:$0xff]
    %v428 = vld [vmem:[#allocation5 + $0x140] sm:$0xff]
    %v429 = vld [vmem:[#allocation5 + $0x148] sm:$0xff]
    %v430 = vld [vmem:[#allocation5 + $0x150] sm:$0xff]
    %v431 = vld [vmem:[#allocation5 + $0x158] sm:$0xff]
    %v432 = vld [vmem:[#allocation5 + $0x160] sm:$0xff]
    %v433 = vld [vmem:[#allocation5 + $0x168] sm:$0xff]
    %v434 = vld [vmem:[#allocation5 + $0x170] sm:$0xff]
    %v435 = vld [vmem:[#allocation5 + $0x178] sm:$0xff]
    %v436 = vld [vmem:[#allocation5 + $0x180] sm:$0xff]
    %v437 = vld [vmem:[#allocation5 + $0x188] sm:$0xff]
    %v438 = vld [vmem:[#allocation5 + $0x190] sm:$0xff]
    %v439 = vld [vmem:[#allocation5 + $0x198] sm:$0xff]
    %v440 = vld [vmem:[#allocation7 + $0x18] sm:$0xf]
    %v441 = vlaneseq
    %v442 = vshrl.u32 %v441, 7
    %v443 = vsub.s32 0, %v442
    %v444 = vrot.slane %v440, %v443
    %445 = vmatprep.subr.mxu0 0.0
    %446 = vmatpush1.msra.mxu0 %v439
    %447 = vmatprep.subr.mxu0 0.0
    %448 = vmatpush1.msra.mxu0 %v438
    %449 = vmatprep.subr.mxu0 0.0
    %450 = vmatpush1.msra.mxu0 %v437
    %451 = vmatprep.subr.mxu0 0.0
    %452 = vmatpush1.msra.mxu0 %v436
    %453 = vmatprep.subr.mxu0 0.0
    %454 = vmatpush1.msra.mxu0 %v435
    %455 = vmatprep.subr.mxu0 0.0
    %456 = vmatpush1.msra.mxu0 %v434
    %457 = vmatprep.subr.mxu0 0.0
    %458 = vmatpush1.msra.mxu0 %v433
    %459 = vmatprep.subr.mxu0 0.0
    %460 = vmatpush1.msra.mxu0 %v432
    %461 = vmatprep.subr.mxu0 0.0
    %462 = vmatpush1.msra.mxu0 %v431
    %463 = vmatprep.subr.mxu0 0.0
    %464 = vmatpush1.msra.mxu0 %v430
    %465 = vmatprep.subr.mxu0 0.0
    %466 = vmatpush1.msra.mxu0 %v429
    %467 = vmatprep.subr.mxu0 0.0
    %468 = vmatpush1.msra.mxu0 %v428
    %469 = vmatprep.subr.mxu0 0.0
    %470 = vmatpush1.msra.mxu0 %v427
    %471 = vmatprep.subr.mxu0 0.0
    %472 = vmatpush1.msra.mxu0 %v426
    %473 = vmatprep.subr.mxu0 0.0
    %474 = vmatpush1.msra.mxu0 %v425
    %475 = vmatprep.subr.mxu0 0.0
    %476 = vmatpush1.msra.mxu0 %v424
    %477 = vmatprep.subr.mxu0 0.0
    %478 = vmatpush2.msra.mxu0 0.0
    %479 = vmatprep.subr.mxu0 0.0
    %480 = vmatpush2.msra.mxu0 0.0
    %481 = vmatprep.subr.mxu0 0.0
    %482 = vmatpush2.msra.mxu0 0.0
    %483 = vmatprep.subr.mxu0 0.0
    %484 = vmatpush2.msra.mxu0 0.0
    %485 = vmatprep.subr.mxu0 0.0
    %486 = vmatpush2.msra.mxu0 0.0
    %487 = vmatprep.subr.mxu0 0.0
    %488 = vmatpush2.msra.mxu0 0.0
    %489 = vmatprep.subr.mxu0 0.0
    %490 = vmatpush2.msra.mxu0 0.0
    %491 = vmatprep.subr.mxu0 0.0
    %492 = vmatpush2.msra.mxu0 0.0
    %493 = vmatprep.subr.mxu0 0.0
    %494 = vmatpush2.msra.mxu0 0.0
    %495 = vmatprep.subr.mxu0 0.0
    %496 = vmatpush2.msra.mxu0 0.0
    %497 = vmatprep.subr.mxu0 0.0
    %498 = vmatpush2.msra.mxu0 0.0
    %499 = vmatprep.subr.mxu0 0.0
    %500 = vmatpush2.msra.mxu0 0.0
    %501 = vmatprep.subr.mxu0 0.0
    %502 = vmatpush2.msra.mxu0 0.0
    %503 = vmatprep.subr.mxu0 0.0
    %504 = vmatpush2.msra.mxu0 0.0
    %505 = vmatprep.subr.mxu0 0.0
    %506 = vmatpush2.msra.mxu0 0.0
    %507 = vmatprep.subr.mxu0 0.0
    %508 = vmatpush2.msra.mxu0 0.0
    %509 = vmatprep.mubr.f32.mxu0 0.0
    %510 = vmatmul.mubr.f32.gmra.mxu0 %v423
    %v511 = vpop.f32.mrf.mxu0
    %v512 = vadd.f32 %v444, %v511
    %v513 = vpop.f32.mrf.mxu0
    %514 = vdwg.mxu0
    %v515 = vrot.slane %v512, 4
    %v516 = vadd.f32 %v512, %v515
    %v517 = vrot.slane %v516, 2
    %v518 = vadd.f32 %v516, %v517
    %v519 = vrot.slane %v518, 1
    %v520 = vadd.f32 %v518, %v519
    %v521 = vmul.f32 %v520, %v142
    %v522 = vmul.f32 %v512, %v512
    %v523 = vrot.slane %v522, 4
    %v524 = vadd.f32 %v522, %v523
    %v525 = vrot.slane %v524, 2
    %v526 = vadd.f32 %v524, %v525
    %v527 = vrot.slane %v526, 1
    %v528 = vadd.f32 %v526, %v527
    %v529 = vmul.f32 %v528, %v142
    %v530 = vmul.f32 %v521, %v521
    %v531 = vsub.f32 %v529, %v530
    %v532 = vsub.f32 %v512, %v521
    %v533 = vadd.f32 %v531, 1e-05
    %v534 = vrsqrt.pop %v533
    %v535 = vmul.f32 %v532, %v534
    %v536 = vlaneseq
    %v537 = vshrl.u32 %v536, 7
    %v538 = vsub.s32 1, %v537
    %v539 = vrot.slane %v440, %v538
    %v540 = vmul.f32 %v535, %v539
    %v541 = vlaneseq
    %v542 = vshrl.u32 %v541, 7
    %v543 = vsub.s32 2, %v542
    %v544 = vrot.slane %v440, %v543
    %v545 = vadd.f32 %v540, %v544
    %v546 = vmax.f32 %v545, 0.0
    %v547 = vld [vmem:[#allocation5 + $0x1a0] sm:$0xff]
    %v548 = vld [vmem:[#allocation5 + $0x1a8] sm:$0xff]
    %v549 = vld [vmem:[#allocation5 + $0x1b0] sm:$0xff]
    %v550 = vld [vmem:[#allocation5 + $0x1b8] sm:$0xff]
    %v551 = vld [vmem:[#allocation5 + $0x1c0] sm:$0xff]
    %v552 = vld [vmem:[#allocation5 + $0x1c8] sm:$0xff]
    %v553 = vld [vmem:[#allocation5 + $0x1d0] sm:$0xff]
    %v554 = vld [vmem:[#allocation5 + $0x1d8] sm:$0xff]
    %v555 = vld [vmem:[#allocation5 + $0x1e0] sm:$0xff]
    %v556 = vld [vmem:[#allocation5 + $0x1e8] sm:$0xff]
    %v557 = vld [vmem:[#allocation5 + $0x1f0] sm:$0xff]
    %v558 = vld [vmem:[#allocation5 + $0x1f8] sm:$0xff]
    %v559 = vld [vmem:[#allocation5 + $0x200] sm:$0xff]
    %v560 = vld [vmem:[#allocation5 + $0x208] sm:$0xff]
    %v561 = vld [vmem:[#allocation5 + $0x210] sm:$0xff]
    %v562 = vld [vmem:[#allocation5 + $0x218] sm:$0xff]
    %v563 = vld [vmem:[#allocation7 + $0x20] sm:$0x1]
    %v564 = vlaneseq
    %v565 = vshrl.u32 %v564, 7
    %v566 = vsub.s32 0, %v565
    %v567 = vrot.slane %v563, %v566
    %568 = vmatprep.subr.mxu0 0.0
    %569 = vmatpush1.msra.mxu0 %v562
    %570 = vmatprep.subr.mxu0 0.0
    %571 = vmatpush1.msra.mxu0 %v561
    %572 = vmatprep.subr.mxu0 0.0
    %573 = vmatpush1.msra.mxu0 %v560
    %574 = vmatprep.subr.mxu0 0.0
    %575 = vmatpush1.msra.mxu0 %v559
    %576 = vmatprep.subr.mxu0 0.0
    %577 = vmatpush1.msra.mxu0 %v558
    %578 = vmatprep.subr.mxu0 0.0
    %579 = vmatpush1.msra.mxu0 %v557
    %580 = vmatprep.subr.mxu0 0.0
    %581 = vmatpush1.msra.mxu0 %v556
    %582 = vmatprep.subr.mxu0 0.0
    %583 = vmatpush1.msra.mxu0 %v555
    %584 = vmatprep.subr.mxu0 0.0
    %585 = vmatpush1.msra.mxu0 %v554
    %586 = vmatprep.subr.mxu0 0.0
    %587 = vmatpush1.msra.mxu0 %v553
    %588 = vmatprep.subr.mxu0 0.0
    %589 = vmatpush1.msra.mxu0 %v552
    %590 = vmatprep.subr.mxu0 0.0
    %591 = vmatpush1.msra.mxu0 %v551
    %592 = vmatprep.subr.mxu0 0.0
    %593 = vmatpush1.msra.mxu0 %v550
    %594 = vmatprep.subr.mxu0 0.0
    %595 = vmatpush1.msra.mxu0 %v549
    %596 = vmatprep.subr.mxu0 0.0
    %597 = vmatpush1.msra.mxu0 %v548
    %598 = vmatprep.subr.mxu0 0.0
    %599 = vmatpush1.msra.mxu0 %v547
    %600 = vmatprep.subr.mxu0 0.0
    %601 = vmatpush2.msra.mxu0 0.0
    %602 = vmatprep.subr.mxu0 0.0
    %603 = vmatpush2.msra.mxu0 0.0
    %604 = vmatprep.subr.mxu0 0.0
    %605 = vmatpush2.msra.mxu0 0.0
    %606 = vmatprep.subr.mxu0 0.0
    %607 = vmatpush2.msra.mxu0 0.0
    %608 = vmatprep.subr.mxu0 0.0
    %609 = vmatpush2.msra.mxu0 0.0
    %610 = vmatprep.subr.mxu0 0.0
    %611 = vmatpush2.msra.mxu0 0.0
    %612 = vmatprep.subr.mxu0 0.0
    %613 = vmatpush2.msra.mxu0 0.0
    %614 = vmatprep.subr.mxu0 0.0
    %615 = vmatpush2.msra.mxu0 0.0
    %616 = vmatprep.subr.mxu0 0.0
    %617 = vmatpush2.msra.mxu0 0.0
    %618 = vmatprep.subr.mxu0 0.0
    %619 = vmatpush2.msra.mxu0 0.0
    %620 = vmatprep.subr.mxu0 0.0
    %621 = vmatpush2.msra.mxu0 0.0
    %622 = vmatprep.subr.mxu0 0.0
    %623 = vmatpush2.msra.mxu0 0.0
    %624 = vmatprep.subr.mxu0 0.0
    %625 = vmatpush2.msra.mxu0 0.0
    %626 = vmatprep.subr.mxu0 0.0
    %627 = vmatpush2.msra.mxu0 0.0
    %628 = vmatprep.subr.mxu0 0.0
    %629 = vmatpush2.msra.mxu0 0.0
    %630 = vmatprep.subr.mxu0 0.0
    %631 = vmatpush2.msra.mxu0 0.0
    %632 = vmatprep.mubr.f32.mxu0 0.0
    %633 = vmatmul.mubr.f32.gmra.mxu0 %v546
    %v634 = vpop.f32.mrf.mxu0
    %v635 = vadd.f32 %v567, %v634
    %v636 = vpop.f32.mrf.mxu0
    %637 = vdwg.mxu0
    %638 = vst [vmem:[#allocation8] sm:$0xff] %v635
    // Predicated region
    $region26: #{tpu_custom_call.1} parent=1 // pred_check
      _
    $region27: #{tpu_custom_call.1} parent=1 // pred_check_branch
      %640 = sbr.rel (0) target = $region29
    $region28: #{tpu_custom_call.1} parent=1 // pred_region
      %s642 = ssub.s32 128, 128
      %643 = vsyncadd [#allocation4], %s642
      %s645 = sshll.u32 [#allocation8], 4
      %s646 = int_to_ptr.vmem [resolvable:$true] %s645
      %648 = dma.vmem_to_hbm [thread:$0]  %s646, 128, %s3, [#allocation4]
    $region29: #{tpu_custom_call.1} parent=1 // pred_fallthru
      _
    // Predicated region
    $region30: #{tpu_custom_call.1} parent=1 // pred_check
      _
    $region31: #{tpu_custom_call.1} parent=1 // pred_check_branch
      %650 = sbr.rel (0) target = $region33
    $region32: #{tpu_custom_call.1} parent=1 // pred_region
      %651 = dma.done [#allocation4], 128
    $region33: #{tpu_custom_call.1} parent=1 // pred_fallthru
      _
    %652 = vsyncpa [#allocation3], 1
    %653 = vsyncpa [#allocation6], 1
    %654 = vsyncpa [#allocation4], 1

</llo_original>
